<compile_context>
chip_gen: v6e
topology: v6e:2x2x1
jax: 0.10.0
libtpu: 0.0.40
codegen_flags: <defaults>
</compile_context>

<pallas_src>
import functools
import numpy as np
import jax
import jax.numpy as jnp
from jax import lax
from jax.experimental import pallas as pl
from jax.experimental.pallas import tpu as pltpu


# Polyphase tap map for ConvTranspose2d(kernel=4, stride=2, padding=1):
#   output pixel (2p+r, 2q+s) = sum_{dh,dw in 0..2} x[p+dh-1, q+dw-1] * w[kh, kw]
#   with kh = _KMAP[r].get(dh), kw = _KMAP[s].get(dw)  (missing entries contribute zero).
_KMAP = ({0: 3, 1: 1}, {1: 2, 2: 0})


def _build_tap_weights(w):
    """w: (C_in, C_out, 4, 4) PyTorch ConvTranspose2d weight -> (9, 4*C_out, C_in) bf16.

    Tap t = dh*3 + dw; rows are (r*2+s)*C_out + co (polyphase-blocked output rows).
    """
    C_in, C_out = w.shape[0], w.shape[1]
    zeros = jnp.zeros((C_out, C_in), jnp.float32)
    taps = []
    for dh in range(3):
        for dw in range(3):
            rows = []
            for r in range(2):
                for s in range(2):
                    kh = _KMAP[r].get(dh)
                    kw = _KMAP[s].get(dw)
                    if kh is None or kw is None:
                        rows.append(zeros)
                    else:
                        rows.append(w[:, :, kh, kw].T.astype(jnp.float32))   # (C_out, C_in)
            taps.append(jnp.concatenate(rows, axis=0))        # (4*C_out, C_in)
    return jnp.stack(taps, axis=0).astype(jnp.bfloat16)       # (9, 4*C_out, C_in)


def _vmem_limit_bytes():
    # Generation-aware scoped-VMEM limit: ~3/4 of physical VMEM, capped at 100 MiB
    # (v5e/v6e: 128 MiB physical -> 96 MiB; v7x: 64 MiB -> 48 MiB).
    try:
        cap = pltpu.get_tpu_info().vmem_capacity_bytes
        return int(min(100 * 1024 * 1024, (cap * 3) // 4))
    except Exception:
        return 48 * 1024 * 1024


@functools.lru_cache(maxsize=None)
def _roll_moves_to_higher_index():
    """True if pltpu.roll(x, +1, axis) moves element i to index i+1 (jnp.roll convention).

    Probed once on-device so the tap-shift sign below is robust to the rotate convention.
    """
    def probe(x_ref, o_ref):
        o_ref[...] = pltpu.roll(x_ref[...], shift=1, axis=1)

    x = jnp.broadcast_to(jnp.arange(128, dtype=jnp.float32), (8, 128))
    y = pl.pallas_call(probe, out_shape=jax.ShapeDtypeStruct((8, 128), jnp.float32))(x)
    return bool(y[0, 1] == 0.0)


def _convT_kernel(x_ref, w_ref, y_ref, sum_ref, ssq_ref, *,
                  H, W, C_in, C_out, roll_up):
    # x_ref:   (1, C_in, H*W)       input image, lane axis = p*W + q (lane-dense)
    # w_ref:   (9, 4*C_out, C_in)   bf16 polyphase tap weights (tap t = dh*3 + dw)
    # y_ref:   (1, 4*C_out, H*W)    bf16; rows = (r*2+s)*C_out + co, lanes = p*W + q
    # sum_ref/ssq_ref: (1, 4*C_out, 1) f32 fused per-image BN statistics
    HW = H * W
    xf = x_ref[0]                                            # (C_in, HW)

    # lane -> (p, q) coordinates for the boundary masks (cheap VPU work, hidden under MXU).
    lane = lax.broadcasted_iota(jnp.int32, (1, HW), 1)
    p = lane // W
    q = lane - p * W

    acc = jnp.zeros((4 * C_out, HW), jnp.float32)
    for dh in range(3):
        for dw in range(3):
            off = (dh - 1) * W + (dw - 1)
            # tap[ci, p*W+q] = x[ci, p+dh-1, q+dw-1] (zero outside the image):
            # one lane roll (XLU slot) + an iota boundary mask -- no padded scratch,
            # no lane-crossing slice/reshape copies.
            if off == 0:
                tap = xf
            else:
                shift = (-off) % HW if roll_up else off % HW
                tap = pltpu.roll(xf, shift=shift, axis=1)
            conds = []
            if dh == 0:
                conds.append(p >= 1)
            elif dh == 2:
                conds.append(p < H - 1)
            if dw == 0:
                conds.append(q >= 1)
            elif dw == 2:
                conds.append(q < W - 1)
            if conds:
                m = conds[0]
                for c in conds[1:]:
                    m = jnp.logical_and(m, c)
                tap = tap * m.astype(tap.dtype)
            # bf16 MXU operands, f32 accumulation (9 accumulating dots, K = C_in).
            acc = acc + jnp.dot(w_ref[dh * 3 + dw], tap.astype(jnp.bfloat16),
                                preferred_element_type=jnp.float32)

    y_ref[0] = acc.astype(y_ref.dtype)
    # Fused BN statistics: per-(phase, channel) sum and sum-of-squares over this image;
    # the 4 phases and the batch are combined in the tiny JAX finish.
    sum_ref[0] = jnp.sum(acc, axis=1, keepdims=True)
    ssq_ref[0] = jnp.sum(acc * acc, axis=1, keepdims=True)


def _bn_add_relu_kernel(up_ref, br_ref, sc_ref, sh_ref, o_ref):
    # up_ref: (1, C_out, 4*H*W) bf16; br_ref/o_ref: (1, C_out, 4*H*W) f32
    # sc_ref/sh_ref: (C_out, 1) f32 -- per-channel lane broadcast.
    up = up_ref[0].astype(jnp.float32)
    y = jnp.maximum(up * sc_ref[...] + sh_ref[...], 0.0)     # BN apply + ReLU
    o_ref[0] = jnp.maximum(y + br_ref[0], 0.0)               # residual add + final ReLU


def base_res_up_unit_forward(x, bridge, weight, bias, gamma, beta, eps=1e-5):
    """x: (N, C_in, H, W); bridge: (N, C_out, 2H, 2W); weight: (C_in, C_out, 4, 4)."""
    del bias  # a per-channel constant before training-mode BatchNorm is exactly cancelled
    N, C_in, H, W = x.shape
    C_out = weight.shape[1]
    H2, W2 = 2 * H, 2 * W
    HW, S2 = H * W, 4 * H * W
    assert bridge.shape == (N, C_out, H2, W2)

    w_taps = _build_tap_weights(weight)                       # (9, 4*C_out, C_in) bf16
    cparams = pltpu.CompilerParams(dimension_semantics=("parallel",),
                                   vmem_limit_bytes=_vmem_limit_bytes())
    roll_up = _roll_moves_to_higher_index()

    # ---- kernel 1: polyphase transposed conv (9 accumulating MXU dots) + BN stats ----
    y_par, ch_sum, ch_ssq = pl.pallas_call(
        functools.partial(_convT_kernel, H=H, W=W, C_in=C_in, C_out=C_out,
                          roll_up=roll_up),
        out_shape=(
            jax.ShapeDtypeStruct((N, 4 * C_out, HW), jnp.bfloat16),
            jax.ShapeDtypeStruct((N, 4 * C_out, 1), jnp.float32),
            jax.ShapeDtypeStruct((N, 4 * C_out, 1), jnp.float32),
        ),
        grid=(N,),
        in_specs=[
            pl.BlockSpec((1, C_in, HW), lambda n: (n, 0, 0)),
            pl.BlockSpec((9, 4 * C_out, C_in), lambda n: (0, 0, 0)),
        ],
        out_specs=(
            pl.BlockSpec((1, 4 * C_out, HW), lambda n: (n, 0, 0)),
            pl.BlockSpec((1, 4 * C_out, 1), lambda n: (n, 0, 0)),
            pl.BlockSpec((1, 4 * C_out, 1), lambda n: (n, 0, 0)),
        ),
        compiler_params=cparams,
    )(x.reshape(N, C_in, HW), w_taps)

    # ---- BN statistics finish (tiny (C_out,)-sized math, plain JAX) ----
    count = jnp.float32(N * H2 * W2)
    mean = ch_sum.reshape(N, 4, C_out).sum(axis=(0, 1)) / count
    var = ch_ssq.reshape(N, 4, C_out).sum(axis=(0, 1)) / count - mean * mean   # biased
    scale = gamma.astype(jnp.float32) * lax.rsqrt(var + eps)
    shift = beta.astype(jnp.float32) - mean * scale

    # ---- the one remaining XLA relayout: polyphase-blocked -> flattened NCHW (bf16) ----
    up_flat = jnp.transpose(
        y_par.reshape(N, 2, 2, C_out, H, W), (0, 3, 4, 1, 5, 2)
    ).reshape(N, C_out, S2)

    # ---- kernel 2: BN apply + ReLU + residual add + ReLU (lane-dense blocks) ----
    out_flat = pl.pallas_call(
        _bn_add_relu_kernel,
        out_shape=jax.ShapeDtypeStruct((N, C_out, S2), jnp.float32),
        grid=(N,),
        in_specs=[
            pl.BlockSpec((1, C_out, S2), lambda n: (n, 0, 0)),
            pl.BlockSpec((1, C_out, S2), lambda n: (n, 0, 0)),
            pl.BlockSpec((C_out, 1), lambda n: (0, 0)),
            pl.BlockSpec((C_out, 1), lambda n: (0, 0)),
        ],
        out_specs=pl.BlockSpec((1, C_out, S2), lambda n: (n, 0, 0)),
        compiler_params=cparams,
    )(up_flat, bridge.reshape(N, C_out, S2),
      scale.reshape(C_out, 1), shift.reshape(C_out, 1))

    return out_flat.reshape(N, C_out, H2, W2)


def _reference_forward(x, bridge, w, b, gamma, beta, eps=1e-5):
    """Pure-JAX reference mirroring the PyTorch forward (training-mode BN)."""
    k = w.shape[2]
    w_oihw = jnp.transpose(w[:, :, ::-1, ::-1], (1, 0, 2, 3))       # (C_out, C_in, k, k)
    pad = k - 1 - 1                                                 # kernel - 1 - padding
    conv = lax.conv_general_dilated(
        x, w_oihw, window_strides=(1, 1), padding=((pad, pad), (pad, pad)),
        lhs_dilation=(2, 2), dimension_numbers=("NCHW", "OIHW", "NCHW"))
    conv = conv + b.reshape(1, -1, 1, 1)
    mean = jnp.mean(conv, axis=(0, 2, 3), keepdims=True)
    var = jnp.mean((conv - mean) ** 2, axis=(0, 2, 3), keepdims=True)
    up = (conv - mean) * lax.rsqrt(var + eps) * gamma.reshape(1, -1, 1, 1) \
        + beta.reshape(1, -1, 1, 1)
    up = jnp.maximum(up, 0.0)
    return jnp.maximum(up + bridge, 0.0)


if __name__ == "__main__":
    N, C_in, C_out, H, W = 2, 4, 4, 16, 16

    key = jax.random.PRNGKey(0)
    kx, kw, kb = jax.random.split(key, 3)

    # deterministic params mimicking the module __init__:
    # xavier_uniform(gain=sqrt(2)) conv weight, zero conv bias, BN gamma=1 / beta=0.
    fan_in, fan_out = C_out * 16, C_in * 16
    bound = float(np.sqrt(2.0) * np.sqrt(6.0 / (fan_in + fan_out)))
    weight = jax.random.uniform(kw, (C_in, C_out, 4, 4), jnp.float32, -bound, bound)
    bias = jnp.zeros((C_out,), jnp.float32)
    gamma = jnp.ones((C_out,), jnp.float32)
    beta = jnp.zeros((C_out,), jnp.float32)

    x = jax.random.normal(kx, (N, C_in, H, W), jnp.float32)
    bridge = jax.random.normal(kb, (N, C_out, 2 * H, 2 * W), jnp.float32)

    out = jax.block_until_ready(
        base_res_up_unit_forward(x, bridge, weight, bias, gamma, beta))
    ref = jax.block_until_ready(
        _reference_forward(x, bridge, weight, bias, gamma, beta))

    assert out.shape == (N, C_out, 2 * H, 2 * W)
    # bf16 MXU operands + bf16 `up` intermediate -> loosened tolerance (review item 2).
    np.testing.assert_allclose(np.asarray(out), np.asarray(ref), rtol=5e-2, atol=5e-2)
    print("KERNEL_OK")
</pallas_src>

<mosaic_0001>
module attributes {stable_mosaic.version = 11 : i64} {
  func.func @probe(%arg0: memref<8x128xf32, #tpu.memory_space<vmem>>, %arg1: memref<8x128xf32, #tpu.memory_space<vmem>>) attributes {dimension_semantics = [], scalar_prefetch = 0 : i64, scratch_operands = 0 : i64, tpu.core_type = #tpu.core_type<tc>} {
    %c0 = arith.constant 0 : index
    %c0_0 = arith.constant 0 : index
    %0 = vector.load %arg0[%c0, %c0_0] : memref<8x128xf32, #tpu.memory_space<vmem>>, vector<8x128xf32>
    %c1_i32 = arith.constant 1 : i32
    %1 = tpu.dynamic_rotate %0 by %c1_i32 dim 1 : vector<8x128xf32>, i32 -> vector<8x128xf32>
    %c0_1 = arith.constant 0 : index
    %c0_2 = arith.constant 0 : index
    %2 = vector.load %arg1[%c0_1, %c0_2] : memref<8x128xf32, #tpu.memory_space<vmem>>, vector<8x128xf32>
    tpu.vector_store %arg1[%c0_1, %c0_2], %1 {strides = array<i32>} : memref<8x128xf32, #tpu.memory_space<vmem>>, vector<8x128xf32>,
    return
  }
}

</mosaic_0001>

<llo_original>
// kernel: tpu_custom_call.1
$region0: #{tpu_custom_call.1}
  #allocation0 [shape = 'u32[]', space=smem, size = 0x4, offset = 0x4, fixed_abs, tag = 'smem constant byte address 0x4 - core index']
  #allocation1 [shape = 'u32[144,128]{1,0:T(1,128)}', space=vmem, size = 0x12000, scoped, tag = 'internal scratch']
  %s0 = inlined_call_operand.hbm [shape: f32[8,128], index: 0, kind: input, shape index: {}]
  %s1 = inlined_call_operand.hbm [shape: f32[8,128], index: 1, kind: output, shape index: {}]
  %s2 = sld [smem:[#allocation0]]
  $region18: #{tpu_custom_call.1} parent=0
    _
  %s4 = ssub.s32 1, %s2
  %s5 = scalar_select 0, %s4, %s2
  $region1: #{tpu_custom_call.1} parent=0
    #allocation2 [shape = 'u8[4096]{0}', space=vmem, size = 0x1000, scoped, tag = 'input window, operand 0, single buffered']
    #allocation3 [shape = 's32[1]{0}', space=sflag, size = 0x4, scoped, tag = 'scoped memory for tpu_custom_call.1']
    #allocation4 [shape = 's32[1]{0}', space=sflag, size = 0x4, scoped, tag = 'scoped memory for tpu_custom_call.1']
    #allocation5 [shape = 'u8[4096]{0}', space=vmem, size = 0x1000, scoped, tag = 'output window, operand 0, single buffered']
    %6 = vsyncpa [#allocation3], 0
    %7 = vsyncpa [#allocation4], 0
    // Predicated region
    $region2: #{tpu_custom_call.1} parent=1 // pred_check
      _
    $region3: #{tpu_custom_call.1} parent=1 // pred_check_branch
      %9 = sbr.rel (0) target = $region5
    $region4: #{tpu_custom_call.1} parent=1 // pred_region
      %s11 = ssub.s32 128, 128
      %12 = vsyncadd [#allocation3], %s11
      %s14 = sshll.u32 [#allocation2], 4
      %s15 = int_to_ptr.vmem [resolvable:$true] %s14
      %17 = dma.hbm_to_vmem [thread:$0]  %s0, 128, %s15, [#allocation3]
    $region5: #{tpu_custom_call.1} parent=1 // pred_fallthru
      _
    // Predicated region
    $region6: #{tpu_custom_call.1} parent=1 // pred_check
      _
    $region7: #{tpu_custom_call.1} parent=1 // pred_check_branch
      %19 = sbr.rel (0) target = $region9
    $region8: #{tpu_custom_call.1} parent=1 // pred_region
      %20 = dma.done [#allocation3], 128
    $region9: #{tpu_custom_call.1} parent=1 // pred_fallthru
      _
    %v21 = vld [vmem:[#allocation2] sm:$0xff]
    %22 = vrot.lane.b32.xlu0 %v21, 1
    %v23 = vpop.permute.xlu0 %22
    %24 = vst [vmem:[#allocation5] sm:$0xff] %v23
    // Predicated region
    $region10: #{tpu_custom_call.1} parent=1 // pred_check
      _
    $region11: #{tpu_custom_call.1} parent=1 // pred_check_branch
      %26 = sbr.rel (0) target = $region13
    $region12: #{tpu_custom_call.1} parent=1 // pred_region
      %s28 = ssub.s32 128, 128
      %29 = vsyncadd [#allocation4], %s28
      %s31 = sshll.u32 [#allocation5], 4
      %s32 = int_to_ptr.vmem [resolvable:$true] %s31
      %34 = dma.vmem_to_hbm [thread:$0]  %s32, 128, %s1, [#allocation4]
    $region13: #{tpu_custom_call.1} parent=1 // pred_fallthru
      _
    // Predicated region
    $region14: #{tpu_custom_call.1} parent=1 // pred_check
      _
    $region15: #{tpu_custom_call.1} parent=1 // pred_check_branch
      %36 = sbr.rel (0) target = $region17
    $region16: #{tpu_custom_call.1} parent=1 // pred_region
      %37 = dma.done [#allocation4], 128
    $region17: #{tpu_custom_call.1} parent=1 // pred_fallthru
      _
    %38 = vsyncpa [#allocation3], 1
    %39 = vsyncpa [#allocation4], 1

</llo_original>
